<compile_context>
chip_gen: v7x
topology: tpu7x:2x2x1
jax: 0.10.0
libtpu: 0.0.40
codegen_flags: <defaults>
</compile_context>

<pallas_src>
import functools

import jax
import jax.numpy as jnp
from jax.experimental import pallas as pl
from jax.experimental.pallas import tpu as pltpu


def _cdiv(a, b):
    return -(-a // b)


def _round_up(x, m):
    return ((x + m - 1) // m) * m


def _rmsnorm_kernel(x_ref, w_ref, o_ref, *, eps):
    # x_ref: (row_tile, dim) tile; w_ref: (1, dim) resident; o_ref: (row_tile, dim).
    x = x_ref[...].astype(jnp.float32)                       # x.float()
    ms = jnp.mean(x * x, axis=-1, keepdims=True)             # x.pow(2).mean(-1, keepdim=True)
    normed = x * jax.lax.rsqrt(ms + eps)                     # x * rsqrt(ms + eps)  (EUP)
    # Match torch dtype flow: cast to x.dtype (.type_as), then * bf16 weight.
    o_ref[...] = normed.astype(o_ref.dtype) * w_ref[...]


def _chip_tuning():
    """Per-generation block-size / core-count / VMEM-limit choices."""
    try:
        kind = jax.devices()[0].device_kind.lower()
    except Exception:
        kind = ""
    if ("v5e" in kind) or ("v5 lite" in kind) or ("v5lite" in kind):
        # 1 TC, 820 GB/s: 2 MiB blocks amortize overhead; fits 16 MiB scoped default.
        return {"target_block_bytes": 2 << 20, "num_cores": 1, "vmem_limit_bytes": None}
    if ("v6" in kind) or ("trillium" in kind):
        # 1 TC, ~1.4 TB/s: 4 MiB blocks; fits 32 MiB scoped default.
        return {"target_block_bytes": 4 << 20, "num_cores": 1, "vmem_limit_bytes": None}
    if "v7" in kind:
        # 2 TCs, ~3.2 TB/s: 6 MiB blocks, raise scoped VMEM (64 MiB physical/TC).
        return {"target_block_bytes": 6 << 20, "num_cores": 2,
                "vmem_limit_bytes": 48 * 1024 * 1024}
    # Unknown / other megacore generations: conservative middle ground.
    return {"target_block_bytes": 4 << 20, "num_cores": 2,
            "vmem_limit_bytes": 48 * 1024 * 1024}


def rmsnorm(x, weight, eps=1e-6):
    """x: (..., dim), weight: (dim,) -> (..., dim), same dtype as x."""
    orig_shape = x.shape
    dim = orig_shape[-1]
    out_dtype = x.dtype

    x2d = x.reshape(-1, dim)
    n_rows = x2d.shape[0]
    itemsize = jnp.dtype(x2d.dtype).itemsize

    tune = _chip_tuning()
    target_block_bytes = tune["target_block_bytes"]
    num_cores = tune["num_cores"]

    # ---- row tile: largest 16-aligned tile near the per-generation target ----
    bytes_per_row = max(1, dim * itemsize)
    row_tile = max(16, (target_block_bytes // bytes_per_row) // 16 * 16)
    row_tile = min(row_tile, _round_up(n_rows, 16))
    steps = _cdiv(n_rows, row_tile)

    # On multi-TensorCore chips, keep the step count a multiple of the core
    # count so dimension_semantics=("parallel",) load-balances evenly.
    if num_cores >= 2 and n_rows >= 32:
        if steps == 1:
            steps = num_cores
        elif steps % num_cores:
            steps += num_cores - (steps % num_cores)
        row_tile = max(16, _round_up(_cdiv(n_rows, steps), 16))
        steps = _cdiv(n_rows, row_tile)

    # ---- scoped VMEM: only raise when the double-buffered footprint needs it ----
    block_bytes = row_tile * dim * itemsize
    needed = 4 * block_bytes + _round_up(dim * itemsize, 4096) + (1 << 20)
    vmem_limit = tune["vmem_limit_bytes"]
    if vmem_limit is None:
        if needed > 15 * 1024 * 1024:   # would not fit the smallest (v5e) default
            vmem_limit = needed
    else:
        vmem_limit = max(vmem_limit, needed)

    w2d = weight.reshape(1, dim)
    kernel = functools.partial(_rmsnorm_kernel, eps=eps)

    out = pl.pallas_call(
        kernel,
        out_shape=jax.ShapeDtypeStruct((n_rows, dim), out_dtype),
        grid_spec=pltpu.PrefetchScalarGridSpec(
            num_scalar_prefetch=0,
            grid=(steps,),
            in_specs=[
                # Partial last block is fine: OOB reads are garbage but row-
                # independent, OOB writes are masked.  Last dim = full extent,
                # so dim need not be a multiple of 128.
                pl.BlockSpec((row_tile, dim), lambda i: (i, 0)),
                pl.BlockSpec((1, dim), lambda i: (0, 0)),   # weight stays resident
            ],
            out_specs=pl.BlockSpec((row_tile, dim), lambda i: (i, 0)),
        ),
        compiler_params=pltpu.CompilerParams(
            dimension_semantics=("parallel",),
            vmem_limit_bytes=vmem_limit,
        ),
    )(x2d, w2d)

    return out.reshape(orig_shape)


def rmsnorm_ref(x, weight, eps=1e-6):
    xf = x.astype(jnp.float32)
    normed = xf * jax.lax.rsqrt(jnp.mean(xf * xf, axis=-1, keepdims=True) + eps)
    return normed.astype(x.dtype) * weight


if __name__ == "__main__":
    key = jax.random.PRNGKey(0)
    k1, k2, k3, k4 = jax.random.split(key, 4)

    # Small shapes consistent with the module: (batch, seq, dim), bf16 weight of ones.
    batch, seq, dim = 2, 8, 256
    x = jax.random.normal(k1, (batch, seq, dim), dtype=jnp.float32).astype(jnp.bfloat16)
    weight = jnp.ones((dim,), dtype=jnp.bfloat16)  # nn.Parameter(torch.ones(dim))

    out = jax.block_until_ready(rmsnorm(x, weight))
    ref = rmsnorm_ref(x, weight)
    assert out.shape == (batch, seq, dim)
    assert out.dtype == jnp.bfloat16
    assert jnp.allclose(out.astype(jnp.float32), ref.astype(jnp.float32),
                        atol=2e-2, rtol=2e-2)

    # Ragged case: rows not a multiple of the tile AND dim not a multiple of 128
    # (exercises the partial last block + full-extent lane dim path).
    batch2, seq2, dim2 = 3, 7, 96
    x2 = jax.random.normal(k2, (batch2, seq2, dim2), dtype=jnp.float32).astype(jnp.bfloat16)
    w2 = (1.0 + 0.1 * jax.random.normal(k3, (dim2,), dtype=jnp.float32)).astype(jnp.bfloat16)

    out2 = jax.block_until_ready(rmsnorm(x2, w2))
    ref2 = rmsnorm_ref(x2, w2)
    assert out2.shape == (batch2, seq2, dim2)
    assert out2.dtype == jnp.bfloat16
    assert jnp.allclose(out2.astype(jnp.float32), ref2.astype(jnp.float32),
                        atol=2e-2, rtol=2e-2)

    # Rows not a multiple of 16, dim a multiple of 128 (partial last block only).
    batch3, seq3, dim3 = 5, 13, 384
    x3 = jax.random.normal(k4, (batch3, seq3, dim3), dtype=jnp.float32).astype(jnp.bfloat16)
    w3 = jnp.ones((dim3,), dtype=jnp.bfloat16)

    out3 = jax.block_until_ready(rmsnorm(x3, w3))
    ref3 = rmsnorm_ref(x3, w3)
    assert out3.shape == (batch3, seq3, dim3)
    assert out3.dtype == jnp.bfloat16
    assert jnp.allclose(out3.astype(jnp.float32), ref3.astype(jnp.float32),
                        atol=2e-2, rtol=2e-2)

    print("KERNEL_OK")
</pallas_src>

<mosaic_0001>
module attributes {stable_mosaic.version = 11 : i64} {
  func.func @_rmsnorm_kernel(%arg0: i32, %arg1: memref<16x256xbf16, #tpu.memory_space<vmem>>, %arg2: memref<1x256xbf16, #tpu.memory_space<vmem>>, %arg3: memref<16x256xbf16, #tpu.memory_space<vmem>>) attributes {dimension_semantics = [#tpu.dimension_semantics<parallel>], iteration_bounds = array<i64: 1>, scalar_prefetch = 0 : i64, scratch_operands = 0 : i64, tpu.core_type = #tpu.core_type<tc>, window_params = [{transform_indices = @transform_0, window_bounds = array<i64: 16, 256>}, {pipeline_mode = #tpu.pipeline_mode<synchronous>, transform_indices = @transform_1, window_bounds = array<i64: 1, 256>}, {transform_indices = @transform_2, window_bounds = array<i64: 16, 256>}]} {
    %c0 = arith.constant 0 : index
    %c0_0 = arith.constant 0 : index
    %0 = vector.load %arg1[%c0, %c0_0] : memref<16x256xbf16, #tpu.memory_space<vmem>>, vector<16x256xbf16>
    %1 = arith.extf %0 : vector<16x256xbf16> to vector<16x256xf32>
    %2 = arith.mulf %1, %1 : vector<16x256xf32>
    %cst = arith.constant dense<0.000000e+00> : vector<16xf32>
    %3 = vector.multi_reduction <add>, %2, %cst [1] : vector<16x256xf32> to vector<16xf32>
    %4 = vector.shape_cast %3 : vector<16xf32> to vector<16x1xf32>
    %cst_1 = arith.constant 2.560000e+02 : f32
    %5 = vector.broadcast %cst_1 : f32 to vector<16x1xf32>
    %6 = arith.divf %4, %5 : vector<16x1xf32>
    %cst_2 = arith.constant 9.99999997E-7 : f32
    %7 = vector.broadcast %cst_2 : f32 to vector<16x1xf32>
    %8 = arith.addf %6, %7 : vector<16x1xf32>
    %9 = math.rsqrt %8 : vector<16x1xf32>
    %10 = vector.broadcast %9 : vector<16x1xf32> to vector<16x256xf32>
    %11 = arith.mulf %1, %10 : vector<16x256xf32>
    %12 = arith.truncf %11 : vector<16x256xf32> to vector<16x256xbf16>
    %c0_3 = arith.constant 0 : index
    %c0_4 = arith.constant 0 : index
    %13 = vector.load %arg2[%c0_3, %c0_4] : memref<1x256xbf16, #tpu.memory_space<vmem>>, vector<1x256xbf16>
    %14 = vector.broadcast %13 : vector<1x256xbf16> to vector<16x256xbf16>
    %15 = arith.mulf %12, %14 : vector<16x256xbf16>
    %c0_5 = arith.constant 0 : index
    %c0_6 = arith.constant 0 : index
    %16 = vector.load %arg3[%c0_5, %c0_6] : memref<16x256xbf16, #tpu.memory_space<vmem>>, vector<16x256xbf16>
    tpu.vector_store %arg3[%c0_5, %c0_6], %15 {strides = array<i32>} : memref<16x256xbf16, #tpu.memory_space<vmem>>, vector<16x256xbf16>,
    return
  }
  func.func @transform_0(%arg0: i32) -> (i32, i32) {
    %c0_i32 = arith.constant 0 : i32
    %c0_i32_0 = arith.constant 0 : i32
    return %arg0, %c0_i32 : i32, i32
  }
  func.func @transform_1(%arg0: i32) -> (i32, i32) {
    %c0_i32 = arith.constant 0 : i32
    %c0_i32_0 = arith.constant 0 : i32
    %c0_i32_1 = arith.constant 0 : i32
    return %c0_i32, %c0_i32_0 : i32, i32
  }
  func.func @transform_2(%arg0: i32) -> (i32, i32) {
    %c0_i32 = arith.constant 0 : i32
    %c0_i32_0 = arith.constant 0 : i32
    return %arg0, %c0_i32 : i32, i32
  }
}

</mosaic_0001>

<llo_original>
// kernel: tpu_custom_call.1
$region0: #{tpu_custom_call.1}
  #allocation0 [shape = 'u32[]', space=smem, size = 0x4, offset = 0x4, fixed_abs, tag = 'smem constant byte address 0x4 - core index']
  #allocation1 [shape = 'u32[144,128]{1,0:T(1,128)}', space=vmem, size = 0x12000, scoped, tag = 'internal scratch']
  %s0 = inlined_call_operand.hbm [shape: bf16[16,256], index: 0, kind: input, shape index: {}]
  %s1 = inlined_call_operand.vmem [shape: bf16[1,256], index: 1, kind: input, shape index: {}]
  %s2 = inlined_call_operand.hbm [shape: bf16[16,256], index: 2, kind: output, shape index: {}]
  %s3 = sld [smem:[#allocation0]]
  $region22: #{tpu_custom_call.1} parent=0
    _
  %s5 = ssub.s32 1, %s3
  %s6 = scalar_select 0, %s5, %s3
  $region1: #{tpu_custom_call.1} parent=0
    #allocation2 [shape = 'u8[8192]{0}', space=vmem, size = 0x2000, scoped, tag = 'input window, operand 0, single buffered']
    #allocation3 [shape = 's32[1]{0}', space=sflag, size = 0x4, scoped, tag = 'scoped memory for tpu_custom_call.1']
    #allocation4 [shape = 's32[1]{0}', space=sflag, size = 0x4, scoped, tag = 'scoped memory for tpu_custom_call.1']
    #allocation5 [shape = 'u8[8192]{0}', space=vmem, size = 0x2000, scoped, tag = 'output window, operand 0, single buffered']
    %7 = vsyncpa [#allocation3], 0
    %8 = vsyncpa [#allocation4], 0
    // Predicated region
    $region2: #{tpu_custom_call.1} parent=1 // pred_check
      _
    $region3: #{tpu_custom_call.1} parent=1 // pred_check_branch
      %10 = sbr.rel (0) target = $region5
    $region4: #{tpu_custom_call.1} parent=1 // pred_region
      %s12 = ssub.s32 256, 256
      %13 = vsyncadd [#allocation3], %s12
      %s14 = sshll.u32 [#allocation2], 4
      %s15 = int_to_ptr.vmem [resolvable:$true] %s14
      %20 = dma.hbm_to_vmem [thread:$0]  %s0, 256, %s15, [#allocation3], 128, 128, 8
    $region5: #{tpu_custom_call.1} parent=1 // pred_fallthru
      _
    // Predicated region
    $region6: #{tpu_custom_call.1} parent=1 // pred_check
      _
    $region7: #{tpu_custom_call.1} parent=1 // pred_check_branch
      %22 = sbr.rel (0) target = $region9
    $region8: #{tpu_custom_call.1} parent=1 // pred_region
      _
    $region9: #{tpu_custom_call.1} parent=1 // pred_fallthru
      _
    // Predicated region
    $region10: #{tpu_custom_call.1} parent=1 // pred_check
      _
    $region11: #{tpu_custom_call.1} parent=1 // pred_check_branch
      %24 = sbr.rel (0) target = $region13
    $region12: #{tpu_custom_call.1} parent=1 // pred_region
      %25 = dma.done [#allocation3], 256
    $region13: #{tpu_custom_call.1} parent=1 // pred_fallthru
      _
    %v26 = vld [vmem:[#allocation2] sm:$0xff]
    %v27 = vld [vmem:[#allocation2 + $0x8] sm:$0xff]
    %v28 = vunpack.c.l.bf16 %v26
    %v29 = vunpack.c.h.bf16 %v26
    %v30 = vunpack.c.l.bf16 %v27
    %v31 = vunpack.c.h.bf16 %v27
    %v32 = vmul.f32 %v28, %v28
    %v33 = vmul.f32 %v29, %v29
    %v34 = vmul.f32 %v30, %v30
    %v35 = vmul.f32 %v31, %v31
    %v36 = vadd.f32 %v32, %v33
    %37 = vadd.xlane.f32.xlu0 %v36
    %v38 = vpop.xlane.xlu0 %37
    %v39 = vadd.f32 %v34, %v35
    %40 = vadd.xlane.f32.xlu0 %v39
    %v41 = vpop.xlane.xlu0 %40
    %v42 = vrcp.pop 256.0
    %v43 = vmul.f32 %v38, %v42
    %v44 = vmul.f32 %v41, %v42
    %v45 = vadd.f32 %v43, 1e-06
    %v46 = vadd.f32 %v44, 1e-06
    %v47 = vrsqrt.pop %v45
    %v48 = vrsqrt.pop %v46
    %v49 = vmul.f32 %v28, %v47
    %v50 = vmul.f32 %v29, %v47
    %v51 = vmul.f32 %v30, %v48
    %v52 = vmul.f32 %v31, %v48
    %v53 = vpack.c.bf16 %v51, %v49
    %v54 = vpack.c.bf16 %v52, %v50
    %v55 = vld [vmem:[%s1] sm:$0x3]
    %v58 = vunpack.c.l.s4 1966171168
    %v59 = vunpack.c.0.s8 %v58
    %v60 = vlaneseq
    %v61 = vshrl.u32 %v60, 7
    %v62 = vsub.s32 %v59, %v61
    %v63 = vrot.slane %v55, %v62
    %v64 = vcombine.high %v63, %v63
    %v66 = vunpack.c.l.s4 1966171168
    %v67 = vunpack.c.0.s8 %v66
    %v68 = vlaneseq
    %v69 = vshrl.u32 %v68, 7
    %v70 = vsub.s32 %v67, %v69
    %v71 = vrot.slane %v63, %v70
    %v73 = vunpack.c.l.s4 1966171168
    %v74 = vunpack.c.0.s8 %v73
    %v75 = vlaneseq
    %v76 = vshrl.u32 %v75, 7
    %v77 = vsub.s32 %v74, %v76
    %v78 = vrot.slane %v64, %v77
    %v80 = vpack.i.b16 %v71, %v71
    %v82 = vlaneseq
    %v83 = vshrl.u32 %v82, 7
    %v84 = vsub.s32 0, %v83
    %v85 = vrot.slane %v80, %v84
    %v87 = vpack.i.b16 %v78, %v78
    %v89 = vlaneseq
    %v90 = vshrl.u32 %v89, 7
    %v91 = vsub.s32 0, %v90
    %v92 = vrot.slane %v87, %v91
    %v93 = vmul.bf16 %v53, %v85
    %v94 = vmul.bf16 %v54, %v92
    %v97 = vunpack.c.l.b16 %v93
    %v98 = vunpack.c.l.b16 %v94
    %v99 = vunpack.c.h.b16 %v93
    %v100 = vunpack.c.h.b16 %v94
    %v101 = vpack.c.b16 %v98, %v97
    %v102 = vpack.c.b16 %v100, %v99
    %105 = vst [vmem:[#allocation5] sm:$0xff] %v101
    %106 = vst [vmem:[#allocation5 + $0x8] sm:$0xff] %v102
    // Predicated region
    $region14: #{tpu_custom_call.1} parent=1 // pred_check
      _
    $region15: #{tpu_custom_call.1} parent=1 // pred_check_branch
      %108 = sbr.rel (0) target = $region17
    $region16: #{tpu_custom_call.1} parent=1 // pred_region
      %s110 = ssub.s32 256, 256
      %111 = vsyncadd [#allocation4], %s110
      %s112 = sshll.u32 [#allocation5], 4
      %s113 = int_to_ptr.vmem [resolvable:$true] %s112
      %118 = dma.vmem_to_hbm [thread:$0]  %s113, 256, %s2, [#allocation4], 128, 128, 8
    $region17: #{tpu_custom_call.1} parent=1 // pred_fallthru
      _
    // Predicated region
    $region18: #{tpu_custom_call.1} parent=1 // pred_check
      _
    $region19: #{tpu_custom_call.1} parent=1 // pred_check_branch
      %120 = sbr.rel (0) target = $region21
    $region20: #{tpu_custom_call.1} parent=1 // pred_region
      %121 = dma.done [#allocation4], 256
    $region21: #{tpu_custom_call.1} parent=1 // pred_fallthru
      _
    %122 = vsyncpa [#allocation3], 1
    %123 = vsyncpa [#allocation4], 1

</llo_original>
